<compile_context>
chip_gen: v6e
topology: v6e:2x2x1
jax: 0.10.0
libtpu: 0.0.40
codegen_flags: <defaults>
</compile_context>

<pallas_src>
import functools

import jax
import jax.numpy as jnp
from jax.experimental import pallas as pl
from jax.experimental.pallas import tpu as pltpu


def _round_up(x, m):
    return (x + m - 1) // m * m


def _im2col_s4k4p1(x):
    """im2col for kernel=4, stride=4, padding=1 (non-overlapping patches)."""
    N, C, H, W = x.shape
    K, S, P = 4, 4, 1
    OH = (H + 2 * P - K) // S + 1
    OW = (W + 2 * P - K) // S + 1
    xp = jnp.pad(x, ((0, 0), (0, 0), (P, P), (P, P)))
    xp = xp[:, :, : OH * S, : OW * S]
    # (N, C, OH, K, OW, K) -> (N, OH, OW, C, K, K) -> (N*OH*OW, C*K*K)
    p = xp.reshape(N, C, OH, K, OW, K).transpose(0, 2, 4, 1, 3, 5)
    return p.reshape(N * OH * OW, C * K * K), OH, OW


def _matmul_bias_silu_kernel(p_ref, w_ref, b_ref, o_ref):
    # p_ref: (TM, Kdim)   patches
    # w_ref: (Kdim, Cout) BN-folded conv weight
    # b_ref: (1, Cout)    BN-folded bias
    # o_ref: (TM, Cout)
    acc = jnp.dot(p_ref[...], w_ref[...], preferred_element_type=jnp.float32)
    y = acc + b_ref[...].astype(jnp.float32)
    o_ref[...] = (y * jax.nn.sigmoid(y)).astype(o_ref.dtype)   # SiLU


def downsample_x4(x, weight, gamma, beta, running_mean, running_var, *, eps=1e-5):
    """Pallas equivalent of Downsample_x4.forward (eval-mode BatchNorm)."""
    N, C_in, H, W = x.shape
    C_out = weight.shape[0]
    K = 4

    patches, OH, OW = _im2col_s4k4p1(x)          # (M, Kdim)
    M, Kdim = patches.shape

    # Fold BN (running stats) into the conv weight / bias — wrapper-side glue.
    scale = gamma / jnp.sqrt(running_var + eps)                 # (C_out,)
    w_mat = weight.reshape(C_out, C_in * K * K).T * scale[None, :]  # (Kdim, C_out)
    bias = (beta - running_mean * scale).reshape(1, C_out)      # (1, C_out)

    # Tile only along M; keep the lane axis (C_out) full / dense.
    TM = 512 if M >= 512 else _round_up(M, 8)
    M_pad = _round_up(M, TM)
    if M_pad != M:
        patches = jnp.pad(patches, ((0, M_pad - M), (0, 0)))

    grid = (M_pad // TM,)

    cost = pl.CostEstimate(
        flops=2 * M_pad * Kdim * C_out,
        transcendentals=M_pad * C_out,
        bytes_accessed=4 * (M_pad * Kdim + Kdim * C_out + C_out + M_pad * C_out),
    )

    out = pl.pallas_call(
        _matmul_bias_silu_kernel,
        out_shape=jax.ShapeDtypeStruct((M_pad, C_out), x.dtype),
        grid_spec=pltpu.PrefetchScalarGridSpec(
            num_scalar_prefetch=0,
            grid=grid,
            in_specs=[
                pl.BlockSpec((TM, Kdim), lambda i: (i, 0)),
                pl.BlockSpec((Kdim, C_out), lambda i: (0, 0)),
                pl.BlockSpec((1, C_out), lambda i: (0, 0)),
            ],
            out_specs=pl.BlockSpec((TM, C_out), lambda i: (i, 0)),
        ),
        compiler_params=pltpu.CompilerParams(
            dimension_semantics=("parallel",)),
        cost_estimate=cost,
    )(patches, w_mat.astype(x.dtype), bias.astype(jnp.float32))

    # (M, C_out) -> (N, C_out, OH, OW)
    out = out[:M].reshape(N, OH, OW, C_out).transpose(0, 3, 1, 2)
    return out


def _reference(x, weight, gamma, beta, running_mean, running_var, *, eps=1e-5):
    """Pure-JAX reference matching the PyTorch forward (eval-mode BN)."""
    y = jax.lax.conv_general_dilated(
        x, weight, window_strides=(4, 4), padding=((1, 1), (1, 1)),
        dimension_numbers=("NCHW", "OIHW", "NCHW"))
    scale = gamma / jnp.sqrt(running_var + eps)
    y = y * scale[None, :, None, None] + (beta - running_mean * scale)[None, :, None, None]
    return y * jax.nn.sigmoid(y)


if __name__ == "__main__":
    # Small shapes consistent with the module: x = (2, 4, 16, 16), out_channels=8.
    N, C_in, C_out, H, W = 2, 4, 8, 16, 16

    key0 = jax.random.PRNGKey(0)
    kx, kw, kg, kb, km, kv = jax.random.split(key0, 6)
    x = jax.random.normal(kx, (N, C_in, H, W), dtype=jnp.float32)
    weight = 0.1 * jax.random.normal(kw, (C_out, C_in, 4, 4), dtype=jnp.float32)
    gamma = 1.0 + 0.1 * jax.random.normal(kg, (C_out,), dtype=jnp.float32)
    beta = 0.1 * jax.random.normal(kb, (C_out,), dtype=jnp.float32)
    running_mean = 0.1 * jax.random.normal(km, (C_out,), dtype=jnp.float32)
    running_var = jnp.abs(1.0 + 0.1 * jax.random.normal(kv, (C_out,), dtype=jnp.float32))

    y = downsample_x4(x, weight, gamma, beta, running_mean, running_var)
    jax.block_until_ready(y)

    OH = (H + 2 - 4) // 4 + 1
    OW = (W + 2 - 4) // 4 + 1
    assert y.shape == (N, C_out, OH, OW)

    y_ref = _reference(x, weight, gamma, beta, running_mean, running_var)
    assert jnp.allclose(y, y_ref, atol=1e-4, rtol=1e-4), float(
        jnp.max(jnp.abs(y - y_ref)))

    print("KERNEL_OK")
</pallas_src>

<mosaic_0001>
module attributes {stable_mosaic.version = 11 : i64} {
  func.func @_matmul_bias_silu_kernel(%arg0: i32, %arg1: memref<32x64xf32, #tpu.memory_space<vmem>>, %arg2: memref<64x8xf32, #tpu.memory_space<vmem>>, %arg3: memref<1x8xf32, #tpu.memory_space<vmem>>, %arg4: memref<32x8xf32, #tpu.memory_space<vmem>>) attributes {dimension_semantics = [#tpu.dimension_semantics<parallel>], iteration_bounds = array<i64: 1>, scalar_prefetch = 0 : i64, scratch_operands = 0 : i64, tpu.core_type = #tpu.core_type<tc>, window_params = [{transform_indices = @transform_0, window_bounds = array<i64: 32, 64>}, {pipeline_mode = #tpu.pipeline_mode<synchronous>, transform_indices = @transform_1, window_bounds = array<i64: 64, 8>}, {pipeline_mode = #tpu.pipeline_mode<synchronous>, transform_indices = @transform_2, window_bounds = array<i64: 1, 8>}, {transform_indices = @transform_3, window_bounds = array<i64: 32, 8>}]} {
    %c0 = arith.constant 0 : index
    %c0_0 = arith.constant 0 : index
    %0 = vector.load %arg1[%c0, %c0_0] : memref<32x64xf32, #tpu.memory_space<vmem>>, vector<32x64xf32>
    %c0_1 = arith.constant 0 : index
    %c0_2 = arith.constant 0 : index
    %1 = vector.load %arg2[%c0_1, %c0_2] : memref<64x8xf32, #tpu.memory_space<vmem>>, vector<64x8xf32>
    %cst = arith.constant dense<0.000000e+00> : vector<32x8xf32>
    %2 = tpu.matmul %0, %1, %cst {dimension_numbers = #tpu.dot_dimension_numbers<[1], [0], [0], [1], [0, 0, 1, 1], [], []>} : vector<32x64xf32>, vector<64x8xf32>, vector<32x8xf32> -> vector<32x8xf32>
    %c0_3 = arith.constant 0 : index
    %c0_4 = arith.constant 0 : index
    %3 = vector.load %arg3[%c0_3, %c0_4] : memref<1x8xf32, #tpu.memory_space<vmem>>, vector<1x8xf32>
    %4 = vector.broadcast %3 : vector<1x8xf32> to vector<32x8xf32>
    %5 = arith.addf %2, %4 : vector<32x8xf32>
    %6 = arith.negf %5 : vector<32x8xf32>
    %7 = math.exp %6 : vector<32x8xf32>
    %cst_5 = arith.constant 1.000000e+00 : f32
    %8 = vector.broadcast %cst_5 : f32 to vector<32x8xf32>
    %9 = arith.addf %8, %7 : vector<32x8xf32>
    %10 = arith.divf %8, %9 : vector<32x8xf32>
    %11 = arith.mulf %5, %10 : vector<32x8xf32>
    %c0_6 = arith.constant 0 : index
    %c0_7 = arith.constant 0 : index
    %12 = vector.load %arg4[%c0_6, %c0_7] : memref<32x8xf32, #tpu.memory_space<vmem>>, vector<32x8xf32>
    tpu.vector_store %arg4[%c0_6, %c0_7], %11 {strides = array<i32>} : memref<32x8xf32, #tpu.memory_space<vmem>>, vector<32x8xf32>,
    return
  }
  func.func @transform_0(%arg0: i32) -> (i32, i32) {
    %c0_i32 = arith.constant 0 : i32
    %c0_i32_0 = arith.constant 0 : i32
    return %arg0, %c0_i32 : i32, i32
  }
  func.func @transform_1(%arg0: i32) -> (i32, i32) {
    %c0_i32 = arith.constant 0 : i32
    %c0_i32_0 = arith.constant 0 : i32
    %c0_i32_1 = arith.constant 0 : i32
    return %c0_i32, %c0_i32_0 : i32, i32
  }
  func.func @transform_2(%arg0: i32) -> (i32, i32) {
    %c0_i32 = arith.constant 0 : i32
    %c0_i32_0 = arith.constant 0 : i32
    %c0_i32_1 = arith.constant 0 : i32
    return %c0_i32, %c0_i32_0 : i32, i32
  }
  func.func @transform_3(%arg0: i32) -> (i32, i32) {
    %c0_i32 = arith.constant 0 : i32
    %c0_i32_0 = arith.constant 0 : i32
    return %arg0, %c0_i32 : i32, i32
  }
}

</mosaic_0001>

<llo_original>
// kernel: tpu_custom_call.1
$region0: #{tpu_custom_call.1}
  #allocation0 [shape = 'u32[]', space=smem, size = 0x4, offset = 0x4, fixed_abs, tag = 'smem constant byte address 0x4 - core index']
  #allocation1 [shape = 'u32[144,128]{1,0:T(1,128)}', space=vmem, size = 0x12000, scoped, tag = 'internal scratch']
  %s0 = inlined_call_operand.vmem [shape: f32[32,64], index: 0, kind: input, shape index: {}]
  %s1 = inlined_call_operand.vmem [shape: f32[64,8], index: 1, kind: input, shape index: {}]
  %s2 = inlined_call_operand.vmem [shape: f32[1,8], index: 2, kind: input, shape index: {}]
  %s3 = inlined_call_operand.vmem [shape: f32[32,8], index: 3, kind: output, shape index: {}]
  %s4 = sld [smem:[#allocation0]]
  $region22: #{tpu_custom_call.1} parent=0
    _
  %s6 = ssub.s32 1, %s4
  %s7 = scalar_select 0, %s6, %s4
  // Predicated region
  $region2: #{tpu_custom_call.1} parent=0 // pred_check
    _
  $region3: #{tpu_custom_call.1} parent=0 // pred_check_branch
    %9 = sbr.rel (0) target = $region5
  $region4: #{tpu_custom_call.1} parent=0 // pred_region
    _
  $region5: #{tpu_custom_call.1} parent=0 // pred_fallthru
    _
  // Predicated region
  $region6: #{tpu_custom_call.1} parent=0 // pred_check
    _
  $region7: #{tpu_custom_call.1} parent=0 // pred_check_branch
    %11 = sbr.rel (0) target = $region9
  $region8: #{tpu_custom_call.1} parent=0 // pred_region
    _
  $region9: #{tpu_custom_call.1} parent=0 // pred_fallthru
    _
  // Predicated region
  $region10: #{tpu_custom_call.1} parent=0 // pred_check
    _
  $region11: #{tpu_custom_call.1} parent=0 // pred_check_branch
    %13 = sbr.rel (0) target = $region13
  $region12: #{tpu_custom_call.1} parent=0 // pred_region
    _
  $region13: #{tpu_custom_call.1} parent=0 // pred_fallthru
    _
  %v14 = vld [vmem:[%s0] sm:$0xff]
  %v15 = vld [vmem:[%s0 + $0x8] sm:$0xff]
  %v16 = vld [vmem:[%s0 + $0x10] sm:$0xff]
  %v17 = vld [vmem:[%s0 + $0x18] sm:$0xff]
  %v18 = vld [vmem:[%s1] sm:$0xff]
  %v19 = vld [vmem:[%s1 + $0x8] sm:$0xff]
  %v20 = vld [vmem:[%s1 + $0x10] sm:$0xff]
  %v21 = vld [vmem:[%s1 + $0x18] sm:$0xff]
  %v22 = vld [vmem:[%s1 + $0x20] sm:$0xff]
  %v23 = vld [vmem:[%s1 + $0x28] sm:$0xff]
  %v24 = vld [vmem:[%s1 + $0x30] sm:$0xff]
  %v25 = vld [vmem:[%s1 + $0x38] sm:$0xff]
  %v26 = vld [vmem:[%s2] sm:$0x1]
  %v28 = vlaneseq
  %v29 = vshrl.u32 %v28, 7
  %v30 = vsub.s32 0, %v29
  %v31 = vrot.slane %v26, %v30
  %vm33 = vcmask 523264
  %v35 = vsel %vm33, %v14, 0
  %v38 = vsel %vm33, %v15, 0
  %v41 = vsel %vm33, %v16, 0
  %v44 = vsel %vm33, %v17, 0
  %46 = vmatprep.subr.mxu0 0.0
  %47 = vmatpush1.msra.mxu0 0.0
  %48 = vmatprep.subr.mxu0 0.0
  %49 = vmatpush1.msra.mxu0 0.0
  %50 = vmatprep.subr.mxu0 0.0
  %51 = vmatpush1.msra.mxu0 0.0
  %52 = vmatprep.subr.mxu0 0.0
  %53 = vmatpush1.msra.mxu0 0.0
  %54 = vmatprep.subr.mxu0 0.0
  %55 = vmatpush1.msra.mxu0 0.0
  %56 = vmatprep.subr.mxu0 0.0
  %57 = vmatpush1.msra.mxu0 0.0
  %58 = vmatprep.subr.mxu0 0.0
  %59 = vmatpush1.msra.mxu0 0.0
  %60 = vmatprep.subr.mxu0 0.0
  %61 = vmatpush1.msra.mxu0 0.0
  %62 = vmatprep.subr.mxu0 0.0
  %63 = vmatpush1.msra.mxu0 %v25
  %64 = vmatprep.subr.mxu0 0.0
  %65 = vmatpush1.msra.mxu0 %v24
  %66 = vmatprep.subr.mxu0 0.0
  %67 = vmatpush1.msra.mxu0 %v23
  %68 = vmatprep.subr.mxu0 0.0
  %69 = vmatpush1.msra.mxu0 %v22
  %70 = vmatprep.subr.mxu0 0.0
  %71 = vmatpush1.msra.mxu0 %v21
  %72 = vmatprep.subr.mxu0 0.0
  %73 = vmatpush1.msra.mxu0 %v20
  %74 = vmatprep.subr.mxu0 0.0
  %75 = vmatpush1.msra.mxu0 %v19
  %76 = vmatprep.subr.mxu0 0.0
  %77 = vmatpush1.msra.mxu0 %v18
  %78 = vmatprep.subr.mxu0 0.0
  %79 = vmatpush2.msra.mxu0 0.0
  %80 = vmatprep.subr.mxu0 0.0
  %81 = vmatpush2.msra.mxu0 0.0
  %82 = vmatprep.subr.mxu0 0.0
  %83 = vmatpush2.msra.mxu0 0.0
  %84 = vmatprep.subr.mxu0 0.0
  %85 = vmatpush2.msra.mxu0 0.0
  %86 = vmatprep.subr.mxu0 0.0
  %87 = vmatpush2.msra.mxu0 0.0
  %88 = vmatprep.subr.mxu0 0.0
  %89 = vmatpush2.msra.mxu0 0.0
  %90 = vmatprep.subr.mxu0 0.0
  %91 = vmatpush2.msra.mxu0 0.0
  %92 = vmatprep.subr.mxu0 0.0
  %93 = vmatpush2.msra.mxu0 0.0
  %94 = vmatprep.subr.mxu0 0.0
  %95 = vmatpush2.msra.mxu0 0.0
  %96 = vmatprep.subr.mxu0 0.0
  %97 = vmatpush2.msra.mxu0 0.0
  %98 = vmatprep.subr.mxu0 0.0
  %99 = vmatpush2.msra.mxu0 0.0
  %100 = vmatprep.subr.mxu0 0.0
  %101 = vmatpush2.msra.mxu0 0.0
  %102 = vmatprep.subr.mxu0 0.0
  %103 = vmatpush2.msra.mxu0 0.0
  %104 = vmatprep.subr.mxu0 0.0
  %105 = vmatpush2.msra.mxu0 0.0
  %106 = vmatprep.subr.mxu0 0.0
  %107 = vmatpush2.msra.mxu0 0.0
  %108 = vmatprep.subr.mxu0 0.0
  %109 = vmatpush2.msra.mxu0 0.0
  %110 = vmatprep.mubr.f32.mxu0 0.0
  %111 = vmatmul.mubr.f32.gmra.mxu0 %v35
  %v112 = vpop.f32.mrf.mxu0
  %v113 = vadd.f32 %v31, %v112
  %v114 = vpop.f32.mrf.mxu0
  %115 = vmatprep.mubr.f32.mxu0 0.0
  %116 = vmatmul.mubr.f32.gmra.mxu0 %v38
  %v117 = vpop.f32.mrf.mxu0
  %v118 = vadd.f32 %v31, %v117
  %v119 = vpop.f32.mrf.mxu0
  %120 = vmatprep.mubr.f32.mxu0 0.0
  %121 = vmatmul.mubr.f32.gmra.mxu0 %v41
  %v122 = vpop.f32.mrf.mxu0
  %v123 = vadd.f32 %v31, %v122
  %v124 = vpop.f32.mrf.mxu0
  %125 = vmatprep.mubr.f32.mxu0 0.0
  %126 = vmatmul.mubr.f32.gmra.mxu0 %v44
  %v127 = vpop.f32.mrf.mxu0
  %v128 = vadd.f32 %v31, %v127
  %v129 = vpop.f32.mrf.mxu0
  %130 = vdwg.mxu0
  %v131 = vxor.u32 %v113, 2147483648
  %v132 = vxor.u32 %v118, 2147483648
  %v133 = vxor.u32 %v123, 2147483648
  %v134 = vxor.u32 %v128, 2147483648
  %v135 = vmul.f32 %v131, 1.442695
  %v136 = vpow.pop %v135
  %v137 = vmul.f32 %v132, 1.442695
  %v138 = vpow.pop %v137
  %v139 = vmul.f32 %v133, 1.442695
  %v140 = vpow.pop %v139
  %v141 = vmul.f32 %v134, 1.442695
  %v142 = vpow.pop %v141
  %v143 = vadd.f32 %v136, 1.0
  %v144 = vadd.f32 %v138, 1.0
  %v145 = vadd.f32 %v140, 1.0
  %v146 = vadd.f32 %v142, 1.0
  %v147 = vrcp.pop %v143
  %v148 = vmul.f32 1.0, %v147
  %v149 = vrcp.pop %v144
  %v150 = vmul.f32 1.0, %v149
  %v151 = vrcp.pop %v145
  %v152 = vmul.f32 1.0, %v151
  %v153 = vrcp.pop %v146
  %v154 = vmul.f32 1.0, %v153
  %v155 = vmul.f32 %v113, %v148
  %v156 = vmul.f32 %v118, %v150
  %v157 = vmul.f32 %v123, %v152
  %v158 = vmul.f32 %v128, %v154
  %vm159 = vcmask 64512
  %160 = vst.msk [vmem:[%s3] sm:$0xff] %vm159, %v155
  %161 = vst.msk [vmem:[%s3 + $0x8] sm:$0xff] %vm159, %v156
  %162 = vst.msk [vmem:[%s3 + $0x10] sm:$0xff] %vm159, %v157
  %163 = vst.msk [vmem:[%s3 + $0x18] sm:$0xff] %vm159, %v158
  // Predicated region
  $region14: #{tpu_custom_call.1} parent=0 // pred_check
    _
  $region15: #{tpu_custom_call.1} parent=0 // pred_check_branch
    %165 = sbr.rel (0) target = $region17
  $region16: #{tpu_custom_call.1} parent=0 // pred_region
    _
  $region17: #{tpu_custom_call.1} parent=0 // pred_fallthru
    _
  // Predicated region
  $region18: #{tpu_custom_call.1} parent=0 // pred_check
    _
  $region19: #{tpu_custom_call.1} parent=0 // pred_check_branch
    %167 = sbr.rel (0) target = $region21
  $region20: #{tpu_custom_call.1} parent=0 // pred_region
    _
  $region21: #{tpu_custom_call.1} parent=0 // pred_fallthru
    _

</llo_original>
